<compile_context>
chip_gen: v7x
topology: tpu7x:2x2x1
jax: 0.10.0
libtpu: 0.0.40
codegen_flags: <defaults>
</compile_context>

<pallas_src>
import jax
import jax.numpy as jnp
from jax.experimental import pallas as pl
from jax.experimental.pallas import tpu as pltpu


def block_model_kernel(x_ref, wt_ref, params_ref, mask_ref, o_ref):
    # ---- Linear (bias omitted: cancelled exactly by BN mean subtraction) ----
    y = jnp.dot(x_ref[...], wt_ref[...], preferred_element_type=jnp.float32)

    # ---- BatchNorm1d, training mode, two-pass (numerically safe) ----
    n = y.shape[0]
    inv_n = 1.0 / n
    mean = jnp.sum(y, axis=0, keepdims=True) * inv_n          # (1, T)
    d = y - mean                                              # centered, reused
    var = jnp.sum(d * d, axis=0, keepdims=True) * inv_n       # biased variance

    p = params_ref[...]                                       # (2, T)
    gamma = p[0:1, :]
    beta = p[1:2, :]
    # Fold dropout's 1/(1-p) = 2 scale into the cheap per-feature rows.
    scale2 = (2.0 * gamma) * jax.lax.rsqrt(var + 1e-5)        # (1, T)
    shift2 = 2.0 * beta                                       # (1, T)

    # ---- BN affine + Dropout(p=0.5) + ReLU, minimal full-tile VPU work ----
    t = d * scale2 + shift2                                   # (N, T)
    keep = mask_ref[...].astype(jnp.float32)                  # 0.0 / 1.0
    o_ref[...] = jnp.maximum(t * keep, 0.0).astype(o_ref.dtype)


def block_model_forward(x, weight, bias, gamma, beta, *, dropout_key,
                        mxu_dtype=jnp.float32, tile_dout=None):
    """x: (N, D_in) f32. weight: (D_out, D_in) PyTorch layout. Returns (N, D_out) f32.

    `bias` is accepted for API parity with nn.Linear but is mathematically
    cancelled by the BatchNorm mean subtraction in training mode, so it is not
    streamed into the kernel.
    """
    del bias  # exactly cancelled by BN mean subtraction (training mode)

    N, D_in = x.shape
    D_out = weight.shape[0]

    LANE = 128
    D_out_pad = pl.cdiv(D_out, LANE) * LANE

    # Generation-aware VMEM budget (v7x: 64 MiB/TC, v5e/v6e: 128 MiB).
    try:
        vmem_cap = int(pltpu.get_tpu_info().vmem_capacity_bytes)
    except Exception:
        vmem_cap = 64 * 1024 * 1024  # conservative fallback (v7x-sized)
    vmem_limit = min(int(vmem_cap * 0.75), 100 * 1024 * 1024)

    itemsize = jnp.dtype(mxu_dtype).itemsize

    def _footprint(t):
        # Double-buffered per-step VMEM estimate (bytes).
        x_b = 2 * N * D_in * itemsize        # x block (constant index)
        w_b = 2 * D_in * t * itemsize        # W^T tile
        m_b = 2 * N * t * 1                  # int8 dropout keep mask
        p_b = 2 * 2 * t * 4                  # gamma/beta slab
        o_b = 2 * N * t * 4                  # f32 output tile
        return x_b + w_b + m_b + p_b + o_b

    if tile_dout is None:
        tile_dout = LANE
        for cand in (512, 256, 128):
            if D_out_pad % cand == 0 and _footprint(cand) <= vmem_limit // 2:
                tile_dout = cand
                break
        # Keep >= 2 feature tiles when possible so v7x's two TCs both get work.
        if (D_out_pad // tile_dout == 1 and tile_dout > LANE
                and (tile_dout // 2) % LANE == 0):
            tile_dout //= 2

    # Pre-transpose weight once ([D_in, D_out]) and zero-pad the feature axis.
    w_t = jnp.zeros((D_in, D_out_pad), mxu_dtype).at[:, :D_out].set(
        weight.T.astype(mxu_dtype))
    # Gamma/beta packed into a single (2, D_out_pad) slab (one DMA per step).
    params = jnp.zeros((2, D_out_pad), jnp.float32)
    params = params.at[0, :D_out].set(gamma).at[1, :D_out].set(beta)
    x_c = x.astype(mxu_dtype)

    # Dropout keep-mask (training mode, p=0.5) as int8: 1 = keep, 0 = drop.
    keep = jax.random.bernoulli(dropout_key, 0.5, (N, D_out_pad)).astype(jnp.int8)

    grid = (D_out_pad // tile_dout,)

    out = pl.pallas_call(
        block_model_kernel,
        out_shape=jax.ShapeDtypeStruct((N, D_out_pad), jnp.float32),
        grid_spec=pltpu.PrefetchScalarGridSpec(
            num_scalar_prefetch=0,
            grid=grid,
            in_specs=[
                pl.BlockSpec((N, D_in), lambda j: (0, 0)),          # x (resident)
                pl.BlockSpec((D_in, tile_dout), lambda j: (0, j)),  # W^T tile
                pl.BlockSpec((2, tile_dout), lambda j: (0, j)),     # gamma/beta
                pl.BlockSpec((N, tile_dout), lambda j: (0, j)),     # int8 mask
            ],
            out_specs=pl.BlockSpec((N, tile_dout), lambda j: (0, j)),
        ),
        compiler_params=pltpu.CompilerParams(
            dimension_semantics=("parallel",),   # feature tiles independent
            vmem_limit_bytes=vmem_limit,
        ),
    )(x_c, w_t, params, keep)

    return out[:, :D_out]


if __name__ == "__main__":
    # Small shapes consistent with the module: x is (batch, input_dim).
    N, D_IN, D_OUT = 8, 32, 64

    key = jax.random.PRNGKey(0)
    kx, kw, kb, kdrop = jax.random.split(key, 4)

    x = jax.random.normal(kx, (N, D_IN), dtype=jnp.float32)

    # Deterministic parameter init (PyTorch-like uniform bound for Linear).
    bound = 1.0 / (D_IN ** 0.5)
    weight = jax.random.uniform(kw, (D_OUT, D_IN), jnp.float32, -bound, bound)
    bias = jax.random.uniform(kb, (D_OUT,), jnp.float32, -bound, bound)
    gamma = jnp.ones((D_OUT,), jnp.float32)   # BatchNorm1d weight init
    beta = jnp.zeros((D_OUT,), jnp.float32)   # BatchNorm1d bias init

    out = block_model_forward(x, weight, bias, gamma, beta, dropout_key=kdrop)
    out = jax.block_until_ready(out)

    assert out.shape == (N, D_OUT)
    assert bool(jnp.all(jnp.isfinite(out)))
    assert bool(jnp.all(out >= 0.0))          # ReLU post-condition
    print("KERNEL_OK")
</pallas_src>

<mosaic_0001>
module attributes {stable_mosaic.version = 11 : i64} {
  func.func @block_model_kernel(%arg0: i32, %arg1: memref<8x32xf32, #tpu.memory_space<vmem>>, %arg2: memref<32x128xf32, #tpu.memory_space<vmem>>, %arg3: memref<2x128xf32, #tpu.memory_space<vmem>>, %arg4: memref<8x128xi8, #tpu.memory_space<vmem>>, %arg5: memref<8x128xf32, #tpu.memory_space<vmem>>) attributes {dimension_semantics = [#tpu.dimension_semantics<parallel>], iteration_bounds = array<i64: 1>, scalar_prefetch = 0 : i64, scratch_operands = 0 : i64, tpu.core_type = #tpu.core_type<tc>, window_params = [{pipeline_mode = #tpu.pipeline_mode<synchronous>, transform_indices = @transform_0, window_bounds = array<i64: 8, 32>}, {transform_indices = @transform_1, window_bounds = array<i64: 32, 128>}, {transform_indices = @transform_2, window_bounds = array<i64: 2, 128>}, {transform_indices = @transform_3, window_bounds = array<i64: 8, 128>}, {transform_indices = @transform_4, window_bounds = array<i64: 8, 128>}]} {
    %c0 = arith.constant 0 : index
    %c0_0 = arith.constant 0 : index
    %0 = vector.load %arg1[%c0, %c0_0] : memref<8x32xf32, #tpu.memory_space<vmem>>, vector<8x32xf32>
    %c0_1 = arith.constant 0 : index
    %c0_2 = arith.constant 0 : index
    %1 = vector.load %arg2[%c0_1, %c0_2] : memref<32x128xf32, #tpu.memory_space<vmem>>, vector<32x128xf32>
    %cst = arith.constant dense<0.000000e+00> : vector<8x128xf32>
    %2 = tpu.matmul %0, %1, %cst {dimension_numbers = #tpu.dot_dimension_numbers<[1], [0], [0], [1], [0, 0, 1, 1], [], []>} : vector<8x32xf32>, vector<32x128xf32>, vector<8x128xf32> -> vector<8x128xf32>
    %cst_3 = arith.constant dense<0.000000e+00> : vector<128xf32>
    %3 = vector.multi_reduction <add>, %2, %cst_3 [0] : vector<8x128xf32> to vector<128xf32>
    %4 = vector.shape_cast %3 : vector<128xf32> to vector<1x128xf32>
    %cst_4 = arith.constant 1.250000e-01 : f32
    %5 = vector.broadcast %cst_4 : f32 to vector<1x128xf32>
    %6 = arith.mulf %4, %5 : vector<1x128xf32>
    %7 = vector.broadcast %6 : vector<1x128xf32> to vector<8x128xf32>
    %8 = arith.subf %2, %7 : vector<8x128xf32>
    %9 = arith.mulf %8, %8 : vector<8x128xf32>
    %cst_5 = arith.constant dense<0.000000e+00> : vector<128xf32>
    %10 = vector.multi_reduction <add>, %9, %cst_5 [0] : vector<8x128xf32> to vector<128xf32>
    %11 = vector.shape_cast %10 : vector<128xf32> to vector<1x128xf32>
    %cst_6 = arith.constant 1.250000e-01 : f32
    %12 = vector.broadcast %cst_6 : f32 to vector<1x128xf32>
    %13 = arith.mulf %11, %12 : vector<1x128xf32>
    %c0_7 = arith.constant 0 : index
    %c0_8 = arith.constant 0 : index
    %14 = vector.load %arg3[%c0_7, %c0_8] : memref<2x128xf32, #tpu.memory_space<vmem>>, vector<2x128xf32>
    %15 = vector.extract_strided_slice %14 {offsets = [0, 0], sizes = [1, 128], strides = [1, 1]} : vector<2x128xf32> to vector<1x128xf32>
    %16 = vector.extract_strided_slice %14 {offsets = [1, 0], sizes = [1, 128], strides = [1, 1]} : vector<2x128xf32> to vector<1x128xf32>
    %cst_9 = arith.constant 2.000000e+00 : f32
    %17 = vector.broadcast %cst_9 : f32 to vector<1x128xf32>
    %18 = arith.mulf %17, %15 : vector<1x128xf32>
    %cst_10 = arith.constant 9.99999974E-6 : f32
    %19 = vector.broadcast %cst_10 : f32 to vector<1x128xf32>
    %20 = arith.addf %13, %19 : vector<1x128xf32>
    %21 = math.rsqrt %20 : vector<1x128xf32>
    %22 = arith.mulf %18, %21 : vector<1x128xf32>
    %cst_11 = arith.constant 2.000000e+00 : f32
    %23 = vector.broadcast %cst_11 : f32 to vector<1x128xf32>
    %24 = arith.mulf %23, %16 : vector<1x128xf32>
    %25 = vector.broadcast %22 : vector<1x128xf32> to vector<8x128xf32>
    %26 = arith.mulf %8, %25 : vector<8x128xf32>
    %27 = vector.broadcast %24 : vector<1x128xf32> to vector<8x128xf32>
    %28 = arith.addf %26, %27 : vector<8x128xf32>
    %c0_12 = arith.constant 0 : index
    %c0_13 = arith.constant 0 : index
    %29 = vector.load %arg4[%c0_12, %c0_13] : memref<8x128xi8, #tpu.memory_space<vmem>>, vector<8x128xi8>
    %30 = arith.sitofp %29 : vector<8x128xi8> to vector<8x128xf32>
    %31 = arith.mulf %28, %30 : vector<8x128xf32>
    %cst_14 = arith.constant 0.000000e+00 : f32
    %32 = vector.broadcast %cst_14 : f32 to vector<8x128xf32>
    %33 = arith.maximumf %31, %32 : vector<8x128xf32>
    %c0_15 = arith.constant 0 : index
    %c0_16 = arith.constant 0 : index
    %34 = vector.load %arg5[%c0_15, %c0_16] : memref<8x128xf32, #tpu.memory_space<vmem>>, vector<8x128xf32>
    tpu.vector_store %arg5[%c0_15, %c0_16], %33 {strides = array<i32>} : memref<8x128xf32, #tpu.memory_space<vmem>>, vector<8x128xf32>,
    return
  }
  func.func @transform_0(%arg0: i32) -> (i32, i32) {
    %c0_i32 = arith.constant 0 : i32
    %c0_i32_0 = arith.constant 0 : i32
    %c0_i32_1 = arith.constant 0 : i32
    return %c0_i32, %c0_i32_0 : i32, i32
  }
  func.func @transform_1(%arg0: i32) -> (i32, i32) {
    %c0_i32 = arith.constant 0 : i32
    %c0_i32_0 = arith.constant 0 : i32
    return %c0_i32, %arg0 : i32, i32
  }
  func.func @transform_2(%arg0: i32) -> (i32, i32) {
    %c0_i32 = arith.constant 0 : i32
    %c0_i32_0 = arith.constant 0 : i32
    return %c0_i32, %arg0 : i32, i32
  }
  func.func @transform_3(%arg0: i32) -> (i32, i32) {
    %c0_i32 = arith.constant 0 : i32
    %c0_i32_0 = arith.constant 0 : i32
    return %c0_i32, %arg0 : i32, i32
  }
  func.func @transform_4(%arg0: i32) -> (i32, i32) {
    %c0_i32 = arith.constant 0 : i32
    %c0_i32_0 = arith.constant 0 : i32
    return %c0_i32, %arg0 : i32, i32
  }
}

</mosaic_0001>

<llo_original>
// kernel: tpu_custom_call.1
$region0: #{tpu_custom_call.1}
  #allocation0 [shape = 'u32[]', space=smem, size = 0x4, offset = 0x4, fixed_abs, tag = 'smem constant byte address 0x4 - core index']
  #allocation1 [shape = 'u32[144,128]{1,0:T(1,128)}', space=vmem, size = 0x12000, scoped, tag = 'internal scratch']
  %s0 = inlined_call_operand.hbm [shape: f32[8,32], index: 0, kind: input, shape index: {}]
  %s1 = inlined_call_operand.hbm [shape: f32[32,128], index: 1, kind: input, shape index: {}]
  %s2 = inlined_call_operand.vmem [shape: f32[2,128], index: 2, kind: input, shape index: {}]
  %s3 = inlined_call_operand.vmem [shape: s8[8,128], index: 3, kind: input, shape index: {}]
  %s4 = inlined_call_operand.hbm [shape: f32[8,128], index: 4, kind: output, shape index: {}]
  %s5 = sld [smem:[#allocation0]]
  $region34: #{tpu_custom_call.1} parent=0
    _
  %s7 = ssub.s32 1, %s5
  %s8 = scalar_select 0, %s7, %s5
  $region1: #{tpu_custom_call.1} parent=0
    #allocation2 [shape = 'u8[4096]{0}', space=vmem, size = 0x1000, scoped, tag = 'input window, operand 0, single buffered']
    #allocation3 [shape = 's32[1]{0}', space=sflag, size = 0x4, scoped, tag = 'scoped memory for tpu_custom_call.1']
    #allocation4 [shape = 's32[1]{0}', space=sflag, size = 0x4, scoped, tag = 'scoped memory for tpu_custom_call.1']
    #allocation5 [shape = 'u8[16384]{0}', space=vmem, size = 0x4000, scoped, tag = 'input window, operand 1, single buffered']
    #allocation6 [shape = 's32[1]{0}', space=sflag, size = 0x4, scoped, tag = 'scoped memory for tpu_custom_call.1']
    #allocation7 [shape = 'u8[4096]{0}', space=vmem, size = 0x1000, scoped, tag = 'output window, operand 0, single buffered']
    %9 = vsyncpa [#allocation3], 0
    %10 = vsyncpa [#allocation6], 0
    %11 = vsyncpa [#allocation4], 0
    // Predicated region
    $region2: #{tpu_custom_call.1} parent=1 // pred_check
      _
    $region3: #{tpu_custom_call.1} parent=1 // pred_check_branch
      %13 = sbr.rel (0) target = $region5
    $region4: #{tpu_custom_call.1} parent=1 // pred_region
      %s15 = ssub.s32 128, 128
      %16 = vsyncadd [#allocation3], %s15
      %s18 = sshll.u32 [#allocation2], 4
      %s19 = int_to_ptr.vmem [resolvable:$true] %s18
      %21 = dma.hbm_to_vmem [thread:$0]  %s0, 128, %s19, [#allocation3]
    $region5: #{tpu_custom_call.1} parent=1 // pred_fallthru
      _
    // Predicated region
    $region6: #{tpu_custom_call.1} parent=1 // pred_check
      _
    $region7: #{tpu_custom_call.1} parent=1 // pred_check_branch
      %23 = sbr.rel (0) target = $region9
    $region8: #{tpu_custom_call.1} parent=1 // pred_region
      %s25 = ssub.s32 512, 512
      %26 = vsyncadd [#allocation6], %s25
      %s27 = sshll.u32 [#allocation5], 4
      %s28 = int_to_ptr.vmem [resolvable:$true] %s27
      %33 = dma.hbm_to_vmem [thread:$0]  %s1, 512, %s28, [#allocation6], 128, 128, 8
    $region9: #{tpu_custom_call.1} parent=1 // pred_fallthru
      _
    // Predicated region
    $region10: #{tpu_custom_call.1} parent=1 // pred_check
      _
    $region11: #{tpu_custom_call.1} parent=1 // pred_check_branch
      %35 = sbr.rel (0) target = $region13
    $region12: #{tpu_custom_call.1} parent=1 // pred_region
      _
    $region13: #{tpu_custom_call.1} parent=1 // pred_fallthru
      _
    // Predicated region
    $region14: #{tpu_custom_call.1} parent=1 // pred_check
      _
    $region15: #{tpu_custom_call.1} parent=1 // pred_check_branch
      %37 = sbr.rel (0) target = $region17
    $region16: #{tpu_custom_call.1} parent=1 // pred_region
      _
    $region17: #{tpu_custom_call.1} parent=1 // pred_fallthru
      _
    // Predicated region
    $region18: #{tpu_custom_call.1} parent=1 // pred_check
      _
    $region19: #{tpu_custom_call.1} parent=1 // pred_check_branch
      %39 = sbr.rel (0) target = $region21
    $region20: #{tpu_custom_call.1} parent=1 // pred_region
      %40 = dma.done [#allocation3], 128
    $region21: #{tpu_custom_call.1} parent=1 // pred_fallthru
      _
    // Predicated region
    $region22: #{tpu_custom_call.1} parent=1 // pred_check
      _
    $region23: #{tpu_custom_call.1} parent=1 // pred_check_branch
      %42 = sbr.rel (0) target = $region25
    $region24: #{tpu_custom_call.1} parent=1 // pred_region
      %43 = dma.done [#allocation6], 512
    $region25: #{tpu_custom_call.1} parent=1 // pred_fallthru
      _
    %v44 = vld [vmem:[#allocation2] sm:$0xff]
    %v45 = vld [vmem:[#allocation5] sm:$0xff]
    %v46 = vld [vmem:[#allocation5 + $0x8] sm:$0xff]
    %v47 = vld [vmem:[#allocation5 + $0x10] sm:$0xff]
    %v48 = vld [vmem:[#allocation5 + $0x18] sm:$0xff]
    %vm49 = vcmask 261120
    %v51 = vsel %vm49, %v44, 0
    %53 = vmatprep.subr.mxu0 0.0
    %54 = vmatpush1.msra.mxu0 %v45
    %55 = vmatprep.subr.mxu0 0.0
    %56 = vmatpush1.msra.mxu0 %v46
    %57 = vmatprep.subr.mxu0 0.0
    %58 = vmatpush1.msra.mxu0 %v47
    %59 = vmatprep.subr.mxu0 0.0
    %60 = vmatpush1.msra.mxu0 %v48
    %61 = vmatprep.subr.mxu0 0.0
    %62 = vmatpush1.msra.mxu0 0.0
    %63 = vmatprep.subr.mxu0 0.0
    %64 = vmatpush1.msra.mxu0 0.0
    %65 = vmatprep.subr.mxu0 0.0
    %66 = vmatpush1.msra.mxu0 0.0
    %67 = vmatprep.subr.mxu0 0.0
    %68 = vmatpush1.msra.mxu0 0.0
    %69 = vmatprep.subr.mxu0 0.0
    %70 = vmatpush1.msra.mxu0 0.0
    %71 = vmatprep.subr.mxu0 0.0
    %72 = vmatpush1.msra.mxu0 0.0
    %73 = vmatprep.subr.mxu0 0.0
    %74 = vmatpush1.msra.mxu0 0.0
    %75 = vmatprep.subr.mxu0 0.0
    %76 = vmatpush1.msra.mxu0 0.0
    %77 = vmatprep.subr.mxu0 0.0
    %78 = vmatpush1.msra.mxu0 0.0
    %79 = vmatprep.subr.mxu0 0.0
    %80 = vmatpush1.msra.mxu0 0.0
    %81 = vmatprep.subr.mxu0 0.0
    %82 = vmatpush1.msra.mxu0 0.0
    %83 = vmatprep.subr.mxu0 0.0
    %84 = vmatpush1.msra.mxu0 0.0
    %85 = vmatprep.subr.mxu0 0.0
    %86 = vmatpush1.msra.mxu0 0.0
    %87 = vmatprep.subr.mxu0 0.0
    %88 = vmatpush1.msra.mxu0 0.0
    %89 = vmatprep.subr.mxu0 0.0
    %90 = vmatpush1.msra.mxu0 0.0
    %91 = vmatprep.subr.mxu0 0.0
    %92 = vmatpush1.msra.mxu0 0.0
    %93 = vmatprep.subr.mxu0 0.0
    %94 = vmatpush1.msra.mxu0 0.0
    %95 = vmatprep.subr.mxu0 0.0
    %96 = vmatpush1.msra.mxu0 0.0
    %97 = vmatprep.subr.mxu0 0.0
    %98 = vmatpush1.msra.mxu0 0.0
    %99 = vmatprep.subr.mxu0 0.0
    %100 = vmatpush1.msra.mxu0 0.0
    %101 = vmatprep.subr.mxu0 0.0
    %102 = vmatpush1.msra.mxu0 0.0
    %103 = vmatprep.subr.mxu0 0.0
    %104 = vmatpush1.msra.mxu0 0.0
    %105 = vmatprep.subr.mxu0 0.0
    %106 = vmatpush1.msra.mxu0 0.0
    %107 = vmatprep.subr.mxu0 0.0
    %108 = vmatpush1.msra.mxu0 0.0
    %109 = vmatprep.subr.mxu0 0.0
    %110 = vmatpush1.msra.mxu0 0.0
    %111 = vmatprep.subr.mxu0 0.0
    %112 = vmatpush1.msra.mxu0 0.0
    %113 = vmatprep.subr.mxu0 0.0
    %114 = vmatpush1.msra.mxu0 0.0
    %115 = vmatprep.subr.mxu0 0.0
    %116 = vmatpush1.msra.mxu0 0.0
    %117 = vmatprep.mubr.f32.mxu0 0.0
    %118 = vmatmul.mubr.f32.gmra.mrb[0].mxu0 %v51
    %v119 = vpop.f32.mrb[0].mxu0
    %v120 = vadd.f32 0.0, %v119
    %v121 = vpop.f32.mrb[0].mxu0
    %122 = vdwg.mxu0
    %v123 = vrot.slane %v120, 4
    %v124 = vadd.f32 %v120, %v123
    %v125 = vrot.slane %v124, 2
    %v126 = vadd.f32 %v124, %v125
    %v127 = vrot.slane %v126, 1
    %v128 = vadd.f32 %v126, %v127
    %v129 = vmul.f32 %v128, 0.125
    %v130 = vsub.f32 %v120, %v129
    %v131 = vmul.f32 %v130, %v130
    %v132 = vrot.slane %v131, 4
    %v133 = vadd.f32 %v131, %v132
    %v134 = vrot.slane %v133, 2
    %v135 = vadd.f32 %v133, %v134
    %v136 = vrot.slane %v135, 1
    %v137 = vadd.f32 %v135, %v136
    %v138 = vmul.f32 %v137, 0.125
    %v139 = vld [vmem:[%s2] sm:$0x3]
    %v140 = vmul.f32 %v139, 2.0
    %v141 = vadd.f32 %v138, 1e-05
    %v142 = vrsqrt.pop %v141
    %v143 = vmul.f32 %v140, %v142
    %v144 = vlaneseq
    %v145 = vshrl.u32 %v144, 7
    %v146 = vsub.s32 0, %v145
    %v147 = vrot.slane %v143, %v146
    %v148 = vmul.f32 %v130, %v147
    %v149 = vlaneseq
    %v150 = vshrl.u32 %v149, 7
    %v151 = vsub.s32 1, %v150
    %v152 = vrot.slane %v140, %v151
    %v153 = vadd.f32 %v148, %v152
    %v154 = vld [vmem:[%s3] sm:$0x3]
    %v155 = vunpack.c.0.s8 %v154
    %v156 = vcvt.s32.f32 %v155
    %v157 = vmul.f32 %v153, %v156
    %v158 = vmax.f32 %v157, 0.0
    %159 = vst [vmem:[#allocation7] sm:$0xff] %v158
    // Predicated region
    $region26: #{tpu_custom_call.1} parent=1 // pred_check
      _
    $region27: #{tpu_custom_call.1} parent=1 // pred_check_branch
      %161 = sbr.rel (0) target = $region29
    $region28: #{tpu_custom_call.1} parent=1 // pred_region
      %s163 = ssub.s32 128, 128
      %164 = vsyncadd [#allocation4], %s163
      %s166 = sshll.u32 [#allocation7], 4
      %s167 = int_to_ptr.vmem [resolvable:$true] %s166
      %169 = dma.vmem_to_hbm [thread:$0]  %s167, 128, %s4, [#allocation4]
    $region29: #{tpu_custom_call.1} parent=1 // pred_fallthru
      _
    // Predicated region
    $region30: #{tpu_custom_call.1} parent=1 // pred_check
      _
    $region31: #{tpu_custom_call.1} parent=1 // pred_check_branch
      %171 = sbr.rel (0) target = $region33
    $region32: #{tpu_custom_call.1} parent=1 // pred_region
      %172 = dma.done [#allocation4], 128
    $region33: #{tpu_custom_call.1} parent=1 // pred_fallthru
      _
    %173 = vsyncpa [#allocation3], 1
    %174 = vsyncpa [#allocation6], 1
    %175 = vsyncpa [#allocation4], 1

</llo_original>
